<compile_context>
chip_gen: v7x
topology: tpu7x:2x2x1
jax: 0.10.0
libtpu: 0.0.40
codegen_flags: <defaults>
</compile_context>

<pallas_src>
import jax
import jax.numpy as jnp
from jax.experimental import pallas as pl
from jax.experimental.pallas import tpu as pltpu

_LANES = 128  # batch columns per row of the 2-D batch layout


def _ols_kernel(w_sref, b_sref, x_ref, o_ref):
    """y[r, c] = sum_k w[k] * x[k, r, c] + b.

    w_sref: (K,) f32 in SMEM   (scalar-prefetched weights)
    b_sref: (1,) f32 in SMEM   (scalar-prefetched bias)
    x_ref:  (K, TR, C) f32 in VMEM (batch laid out 2-D: dense sublane x lane)
    o_ref:  (TR, C) f32 in VMEM
    """
    k_feats = x_ref.shape[0]
    # Fold the bias into the k=0 term: no zeros broadcast, no separate bias add.
    acc = x_ref[0] * w_sref[0] + b_sref[0]
    for k in range(1, k_feats):  # static unroll: 4 more broadcast FMAs on the VPU
        acc = acc + x_ref[k] * w_sref[k]
    o_ref[...] = acc.astype(o_ref.dtype)


def ols_forward(x, w, b, *, rows_per_tile=1024, min_kernel_batch=16384):
    """Forward pass of nn.Linear(5, 1): y = x @ w.T + b.

    x: (B, K) float32
    w: (1, K) float32  (PyTorch layout: (out_features, in_features))
    b: (1,)   float32
    returns: (B, 1) float32
    """
    B, K = x.shape
    n_out, K2 = w.shape
    assert K == K2 and n_out == 1 and b.shape == (n_out,)

    # Small-batch fallback: relayout + launch overhead would dominate the kernel.
    if B < min_kernel_batch:
        return x @ w.T + b[None, :]

    # ---- Relayout to a sublane/lane-dense (K, R, C) slab ------------------
    b_pad = pl.cdiv(B, _LANES) * _LANES          # minimal pad to the lane boundary
    x_kb = x.T
    if b_pad != B:
        x_kb = jnp.pad(x_kb, ((0, 0), (0, b_pad - B)))
    r_rows = b_pad // _LANES
    x_krc = x_kb.reshape(K, r_rows, _LANES)

    # ---- Tile the R axis ----------------------------------------------------
    if r_rows <= 8:
        tr = r_rows                               # full extent (allowed as-is)
    else:
        tr = min(rows_per_tile, r_rows)
        tr = max(8, (tr // 8) * 8)                # sublane-aligned tile
        # v7x megacore: ensure the "parallel" grid has >= 2 tiles so both
        # TensorCores (and the full HBM feed) stay busy.
        half = ((r_rows + 15) // 16) * 8          # ceil(R/2) rounded up to mult of 8
        tr = min(tr, half)
    n_tiles = pl.cdiv(r_rows, tr)

    w_vec = w.reshape(K).astype(jnp.float32)
    b_vec = b.reshape(1).astype(jnp.float32)

    out = pl.pallas_call(
        _ols_kernel,
        out_shape=jax.ShapeDtypeStruct((r_rows, _LANES), x.dtype),
        grid_spec=pltpu.PrefetchScalarGridSpec(
            num_scalar_prefetch=2,                       # w_vec, b_vec -> SMEM
            grid=(n_tiles,),
            in_specs=[
                pl.BlockSpec((K, tr, _LANES), lambda i, w_s, b_s: (0, i, 0)),
            ],
            out_specs=pl.BlockSpec((tr, _LANES), lambda i, w_s, b_s: (i, 0)),
        ),
        compiler_params=pltpu.CompilerParams(
            dimension_semantics=("parallel",),           # batch tiles independent
        ),
        cost_estimate=pl.CostEstimate(
            flops=2 * K * b_pad,
            transcendentals=0,
            bytes_accessed=4 * ((K + 1) * b_pad + K + 1),
        ),
    )(w_vec, b_vec, x_krc)

    # Back to PyTorch output layout (B, 1), dropping the padding.
    return out.reshape(-1)[:B].reshape(B, 1)


if __name__ == "__main__":
    key = jax.random.PRNGKey(0)
    k_x, k_w, k_b = jax.random.split(key, 3)

    in_features, out_features = 5, 1
    batch = 8

    # nn.Linear default init: uniform in [-1/sqrt(fan_in), 1/sqrt(fan_in)].
    bound = 1.0 / jnp.sqrt(jnp.float32(in_features))
    w = jax.random.uniform(
        k_w, (out_features, in_features), jnp.float32, -bound, bound
    )
    b = jax.random.uniform(k_b, (out_features,), jnp.float32, -bound, bound)
    x = jax.random.normal(k_x, (batch, in_features), jnp.float32)

    # 1) Force the Pallas kernel path at the tiny demo batch.
    y = ols_forward(x, w, b, min_kernel_batch=0)
    y = jax.block_until_ready(y)
    y_ref = x @ w.T + b[None, :]
    assert y.shape == (batch, out_features)
    assert jnp.allclose(y, y_ref, atol=1e-5, rtol=1e-5)

    # 2) Multi-tile + ragged-last-tile path through the kernel (still small).
    batch2 = 2125                                  # R=17 rows -> 2 grid tiles
    x2 = jax.random.normal(k_x, (batch2, in_features), jnp.float32)
    y2 = jax.block_until_ready(ols_forward(x2, w, b, min_kernel_batch=0))
    y2_ref = x2 @ w.T + b[None, :]
    assert y2.shape == (batch2, out_features)
    assert jnp.allclose(y2, y2_ref, atol=1e-5, rtol=1e-5)

    # 3) Natural dispatch at small batch takes the pure-jnp fallback path.
    y3 = jax.block_until_ready(ols_forward(x, w, b))
    assert jnp.allclose(y3, y_ref, atol=1e-5, rtol=1e-5)

    print("KERNEL_OK")
</pallas_src>

<mosaic_0001>
module attributes {stable_mosaic.version = 11 : i64} {
  func.func @_ols_kernel(%arg0: i32, %arg1: memref<5xf32, #tpu.memory_space<smem>>, %arg2: memref<1xf32, #tpu.memory_space<smem>>, %arg3: memref<5x1x128xf32, #tpu.memory_space<vmem>>, %arg4: memref<1x128xf32, #tpu.memory_space<vmem>>) attributes {dimension_semantics = [#tpu.dimension_semantics<parallel>], iteration_bounds = array<i64: 1>, scalar_prefetch = 2 : i64, scratch_operands = 0 : i64, tpu.core_type = #tpu.core_type<tc>, window_params = [{transform_indices = @transform_0, window_bounds = array<i64: 5, 1, 128>}, {transform_indices = @transform_1, window_bounds = array<i64: 1, 128>}]} {
    %c0 = arith.constant 0 : index
    %c0_0 = arith.constant 0 : index
    %c0_1 = arith.constant 0 : index
    %0 = vector.load %arg3[%c0, %c0_0, %c0_1] : memref<5x1x128xf32, #tpu.memory_space<vmem>>, vector<1x1x128xf32>
    %1 = vector.shape_cast %0 : vector<1x1x128xf32> to vector<1x128xf32>
    %c0_2 = arith.constant 0 : index
    %2 = memref.load %arg1[%c0_2] : memref<5xf32, #tpu.memory_space<smem>>
    %3 = vector.broadcast %2 : f32 to vector<1x128xf32>
    %4 = arith.mulf %1, %3 : vector<1x128xf32>
    %c0_3 = arith.constant 0 : index
    %5 = memref.load %arg2[%c0_3] : memref<1xf32, #tpu.memory_space<smem>>
    %6 = vector.broadcast %5 : f32 to vector<1x128xf32>
    %7 = arith.addf %4, %6 : vector<1x128xf32>
    %c1 = arith.constant 1 : index
    %c0_4 = arith.constant 0 : index
    %c0_5 = arith.constant 0 : index
    %8 = vector.load %arg3[%c1, %c0_4, %c0_5] : memref<5x1x128xf32, #tpu.memory_space<vmem>>, vector<1x1x128xf32>
    %9 = vector.shape_cast %8 : vector<1x1x128xf32> to vector<1x128xf32>
    %c1_6 = arith.constant 1 : index
    %10 = memref.load %arg1[%c1_6] : memref<5xf32, #tpu.memory_space<smem>>
    %11 = vector.broadcast %10 : f32 to vector<1x128xf32>
    %12 = arith.mulf %9, %11 : vector<1x128xf32>
    %13 = arith.addf %7, %12 : vector<1x128xf32>
    %c2 = arith.constant 2 : index
    %c0_7 = arith.constant 0 : index
    %c0_8 = arith.constant 0 : index
    %14 = vector.load %arg3[%c2, %c0_7, %c0_8] : memref<5x1x128xf32, #tpu.memory_space<vmem>>, vector<1x1x128xf32>
    %15 = vector.shape_cast %14 : vector<1x1x128xf32> to vector<1x128xf32>
    %c2_9 = arith.constant 2 : index
    %16 = memref.load %arg1[%c2_9] : memref<5xf32, #tpu.memory_space<smem>>
    %17 = vector.broadcast %16 : f32 to vector<1x128xf32>
    %18 = arith.mulf %15, %17 : vector<1x128xf32>
    %19 = arith.addf %13, %18 : vector<1x128xf32>
    %c3 = arith.constant 3 : index
    %c0_10 = arith.constant 0 : index
    %c0_11 = arith.constant 0 : index
    %20 = vector.load %arg3[%c3, %c0_10, %c0_11] : memref<5x1x128xf32, #tpu.memory_space<vmem>>, vector<1x1x128xf32>
    %21 = vector.shape_cast %20 : vector<1x1x128xf32> to vector<1x128xf32>
    %c3_12 = arith.constant 3 : index
    %22 = memref.load %arg1[%c3_12] : memref<5xf32, #tpu.memory_space<smem>>
    %23 = vector.broadcast %22 : f32 to vector<1x128xf32>
    %24 = arith.mulf %21, %23 : vector<1x128xf32>
    %25 = arith.addf %19, %24 : vector<1x128xf32>
    %c4 = arith.constant 4 : index
    %c0_13 = arith.constant 0 : index
    %c0_14 = arith.constant 0 : index
    %26 = vector.load %arg3[%c4, %c0_13, %c0_14] : memref<5x1x128xf32, #tpu.memory_space<vmem>>, vector<1x1x128xf32>
    %27 = vector.shape_cast %26 : vector<1x1x128xf32> to vector<1x128xf32>
    %c4_15 = arith.constant 4 : index
    %28 = memref.load %arg1[%c4_15] : memref<5xf32, #tpu.memory_space<smem>>
    %29 = vector.broadcast %28 : f32 to vector<1x128xf32>
    %30 = arith.mulf %27, %29 : vector<1x128xf32>
    %31 = arith.addf %25, %30 : vector<1x128xf32>
    %c0_16 = arith.constant 0 : index
    %c0_17 = arith.constant 0 : index
    %32 = vector.load %arg4[%c0_16, %c0_17] : memref<1x128xf32, #tpu.memory_space<vmem>>, vector<1x128xf32>
    tpu.vector_store %arg4[%c0_16, %c0_17], %31 {strides = array<i32>} : memref<1x128xf32, #tpu.memory_space<vmem>>, vector<1x128xf32>,
    return
  }
  func.func @transform_0(%arg0: i32, %arg1: memref<5xf32, #tpu.memory_space<smem>>, %arg2: memref<1xf32, #tpu.memory_space<smem>>) -> (i32, i32, i32) {
    %c0_i32 = arith.constant 0 : i32
    %c0_i32_0 = arith.constant 0 : i32
    %c0_i32_1 = arith.constant 0 : i32
    return %c0_i32, %arg0, %c0_i32_0 : i32, i32, i32
  }
  func.func @transform_1(%arg0: i32, %arg1: memref<5xf32, #tpu.memory_space<smem>>, %arg2: memref<1xf32, #tpu.memory_space<smem>>) -> (i32, i32) {
    %c0_i32 = arith.constant 0 : i32
    %c0_i32_0 = arith.constant 0 : i32
    return %arg0, %c0_i32 : i32, i32
  }
}

</mosaic_0001>

<llo_original>
// kernel: tpu_custom_call.1
$region0: #{tpu_custom_call.1}
  #allocation0 [shape = 'u32[]', space=smem, size = 0x4, offset = 0x4, fixed_abs, tag = 'smem constant byte address 0x4 - core index']
  #allocation1 [shape = 'u32[144,128]{1,0:T(1,128)}', space=vmem, size = 0x12000, scoped, tag = 'internal scratch']
  #allocation2 [shape = 's32[1]{0}', space=sflag, size = 0x4, scoped, tag = 'scoped memory for tpu_custom_call.1']
  #allocation3 [shape = 'u8[512]{0}', space=smem, size = 0x200, scoped, tag = 'prefetched SMEM operand 0']
  #allocation4 [shape = 'f32[1]{0:T(128)S(6)}', space=smem, size = 0x200, scoped, tag = 'prefetched SMEM operand 1']
  %s0 = inlined_call_operand.vmem [shape: f32[5], index: 0, kind: input, shape index: {}]
  %s1 = inlined_call_operand.<no memory space> [shape: f32[1], index: 1, kind: input, shape index: {}]
  %s2 = inlined_call_operand.vmem [shape: f32[5,1,128], index: 2, kind: input, shape index: {}]
  %s3 = inlined_call_operand.hbm [shape: f32[1,128], index: 3, kind: output, shape index: {}]
  %s4 = sld [smem:[#allocation0]]
  $region14: #{tpu_custom_call.1} parent=0
    _
  %s6 = ssub.s32 1, %s4
  %s7 = scalar_select 0, %s6, %s4
  %s8 = sshll.u32 %s0, 4
  %s9 = int_to_ptr.vmem [resolvable:$true] %s8
  %11 = dma.vmem_to_smem %s9, 16, [#allocation3], [#allocation2]
  %12 = sst [smem:[#allocation4]] %s1
  %13 = dma.done [#allocation2], 16
  %14 = sfence
  $region1: #{tpu_custom_call.1} parent=0
    #allocation5 [shape = 'u8[512]{0}', space=vmem, size = 0x400, scoped, tag = 'output window, operand 0, single buffered']
    #allocation6 [shape = 's32[1]{0}', space=sflag, size = 0x4, scoped, tag = 'scoped memory for tpu_custom_call.1']
    %15 = vsyncpa [#allocation6], 0
    // Predicated region
    $region2: #{tpu_custom_call.1} parent=1 // pred_check
      _
    $region3: #{tpu_custom_call.1} parent=1 // pred_check_branch
      %17 = sbr.rel (0) target = $region5
    $region4: #{tpu_custom_call.1} parent=1 // pred_region
      _
    $region5: #{tpu_custom_call.1} parent=1 // pred_fallthru
      _
    %v18 = vld [vmem:[%s2] sm:$0x1]
    %s19 = sld [smem:[#allocation3]]
    %v20 = vstv %s19
    %v21 = vmul.f32 %v18, %v20
    %s22 = sld [smem:[#allocation4]]
    %v23 = vstv %s22
    %v24 = vadd.f32 %v21, %v23
    %s25 = scalar_lea.vmem %s2, 1
    %v26 = vld [vmem:[%s25] sm:$0x1]
    %s27 = sld [smem:[#allocation3 + $0x1]]
    %v28 = vstv %s27
    %v29 = vmul.f32 %v26, %v28
    %v30 = vadd.f32 %v24, %v29
    %s31 = scalar_lea.vmem %s2, 2
    %v32 = vld [vmem:[%s31] sm:$0x1]
    %s33 = sld [smem:[#allocation3 + $0x2]]
    %v34 = vstv %s33
    %v35 = vmul.f32 %v32, %v34
    %v36 = vadd.f32 %v30, %v35
    %s37 = scalar_lea.vmem %s2, 3
    %v38 = vld [vmem:[%s37] sm:$0x1]
    %s39 = sld [smem:[#allocation3 + $0x3]]
    %v40 = vstv %s39
    %v41 = vmul.f32 %v38, %v40
    %v42 = vadd.f32 %v36, %v41
    %s43 = scalar_lea.vmem %s2, 4
    %v44 = vld [vmem:[%s43] sm:$0x1]
    %s45 = sld [smem:[#allocation3 + $0x4]]
    %v46 = vstv %s45
    %v47 = vmul.f32 %v44, %v46
    %v48 = vadd.f32 %v42, %v47
    %49 = vst [vmem:[#allocation5] sm:$0x1] %v48
    // Predicated region
    $region6: #{tpu_custom_call.1} parent=1 // pred_check
      _
    $region7: #{tpu_custom_call.1} parent=1 // pred_check_branch
      %51 = sbr.rel (0) target = $region9
    $region8: #{tpu_custom_call.1} parent=1 // pred_region
      %s53 = ssub.s32 16, 16
      %54 = vsyncadd [#allocation6], %s53
      %s56 = sshll.u32 [#allocation5], 4
      %s57 = int_to_ptr.vmem [resolvable:$true] %s56
      %59 = dma.vmem_to_hbm [thread:$0]  %s57, 16, %s3, [#allocation6]
    $region9: #{tpu_custom_call.1} parent=1 // pred_fallthru
      _
    // Predicated region
    $region10: #{tpu_custom_call.1} parent=1 // pred_check
      _
    $region11: #{tpu_custom_call.1} parent=1 // pred_check_branch
      %61 = sbr.rel (0) target = $region13
    $region12: #{tpu_custom_call.1} parent=1 // pred_region
      %62 = dma.done [#allocation6], 16
    $region13: #{tpu_custom_call.1} parent=1 // pred_fallthru
      _
    %63 = vsyncpa [#allocation6], 1

</llo_original>
